<compile_context>
chip_gen: v7x
topology: tpu7x:2x2x1
jax: 0.10.0
libtpu: 0.0.40
codegen_flags: <defaults>
</compile_context>

<pallas_src>
import functools

import jax
import jax.numpy as jnp
from jax.experimental import pallas as pl
from jax.experimental.pallas import tpu as pltpu


# ---- packed parameter slab layout (f32, shape (56, 128)) -------------------
# rows 0:32 , cols 0:8   -> fc1 weight  (32, 8)   (PyTorch (out, in) layout)
# rows 0:32 , col  8     -> fc1 bias    (32, 1)
# rows 32:48, cols 0:32  -> fc2 weight  (16, 32)
# rows 32:48, col  32    -> fc2 bias    (16, 1)
# row  48   , cols 0:16  -> fc3 weight  (1, 16)
# row  48   , col  16    -> fc3 bias    (1, 1)
_SLAB_SHAPE = (56, 128)


def pack_params(w1, b1, w2, b2, w3, b3):
    """Pack PyTorch-convention params ((out,in) weights, (out,) biases).

    Call ONCE (outside the per-forward path) and pass the slab to mlp_forward.
    """
    slab = jnp.zeros(_SLAB_SHAPE, jnp.float32)
    slab = slab.at[0:32, 0:8].set(w1.astype(jnp.float32))
    slab = slab.at[0:32, 8:9].set(b1.reshape(32, 1).astype(jnp.float32))
    slab = slab.at[32:48, 0:32].set(w2.astype(jnp.float32))
    slab = slab.at[32:48, 32:33].set(b2.reshape(16, 1).astype(jnp.float32))
    slab = slab.at[48:49, 0:16].set(w3.reshape(1, 16).astype(jnp.float32))
    slab = slab.at[48:49, 16:17].set(b3.reshape(1, 1).astype(jnp.float32))
    return slab


def mlp_kernel(p_ref, x_ref, o_ref, *, compute_dtype):
    # Static slices into the single packed parameter slab (VMEM-resident).
    w1 = p_ref[0:32, 0:8].astype(compute_dtype)      # (32, 8)
    b1 = p_ref[0:32, 8:9]                            # (32, 1)  f32
    w2 = p_ref[32:48, 0:32].astype(compute_dtype)    # (16, 32)
    b2 = p_ref[32:48, 32:33]                         # (16, 1)  f32
    w3 = p_ref[48:49, 0:16].astype(compute_dtype)    # (1, 16)
    b3 = p_ref[48:49, 16:17]                         # (1, 1)   f32

    xb = x_ref[...].astype(compute_dtype)            # (TB, 8) batch-major tile

    # fc1 + ReLU: fold the transpose into the contraction (XLU/MXU handles it;
    # both units are idle here) -> (32, 8) @ (8, TB) = (32, TB), lane-dense.
    h1 = jnp.dot(w1, xb.T, preferred_element_type=jnp.float32) + b1
    h1 = jnp.maximum(h1, 0.0).astype(compute_dtype)
    # fc2 + ReLU : (16, 32) @ (32, TB) -> (16, TB)
    h2 = jnp.dot(w2, h1, preferred_element_type=jnp.float32) + b2
    h2 = jnp.maximum(h2, 0.0).astype(compute_dtype)
    # fc3 : (1, 16) @ (16, TB) -> (1, TB)  packed, lane-dense output row
    out = jnp.dot(w3, h2, preferred_element_type=jnp.float32) + b3
    o_ref[...] = out.astype(o_ref.dtype)


def _choose_tb(B, block_b):
    """Batch tile: big enough to amortize per-step overhead, but >=4 grid
    steps at large B so v7x's 2 TensorCores both get work and stay pipelined."""
    if B <= 512:
        return B                                  # single full-array block
    tb = -(-B // 4)                               # cdiv(B, 4)
    tb = ((tb + 127) // 128) * 128                # lane-aligned out tile
    return min(tb, block_b)


def mlp_forward(x, params_slab, *, block_b=16384, compute_dtype=jnp.float32):
    """x: (B, 8); params_slab: pack_params(...) output (built once, reused).

    compute_dtype=jnp.bfloat16 (and/or passing x as bf16) trades a little
    accuracy for fewer input bytes / MXU passes -- mostly useful on v5e.
    """
    B = x.shape[0]
    tb = _choose_tb(B, block_b)
    grid = (pl.cdiv(B, tb),)

    kernel = functools.partial(mlp_kernel, compute_dtype=compute_dtype)
    out_row = pl.pallas_call(
        kernel,
        out_shape=jax.ShapeDtypeStruct((1, B), jnp.float32),
        grid=grid,
        in_specs=[
            # One packed parameter slab; constant index_map -> fetched once,
            # stays VMEM-resident across all batch steps.
            pl.BlockSpec(_SLAB_SHAPE, lambda i: (0, 0)),
            # Batch-major x tile straight from HBM (no wrapper transpose).
            pl.BlockSpec((tb, 8), lambda i: (i, 0)),
        ],
        # Packed (1, TB) output row: batch maps to lanes -> unmasked stores.
        out_specs=pl.BlockSpec((1, tb), lambda i: (0, i)),
        compiler_params=pltpu.CompilerParams(
            dimension_semantics=("parallel",),   # shards batch over v7x's 2 TCs
            # The (tb, 8) f32 block is lane-padded to 128 in VMEM (16x raw);
            # give headroom over the 16/32 MiB scoped defaults (safe on v5e/v6e/v7x).
            vmem_limit_bytes=48 * 1024 * 1024,
        ),
    )(params_slab, x)
    return out_row.reshape(B, 1)


def init_linear(key, in_f, out_f):
    # PyTorch nn.Linear default init: U(-1/sqrt(in_f), +1/sqrt(in_f)),
    # weight stored as (out_features, in_features), bias as (out_features,).
    kw, kb = jax.random.split(key)
    bound = 1.0 / float(in_f) ** 0.5
    w = jax.random.uniform(kw, (out_f, in_f), jnp.float32, -bound, bound)
    b = jax.random.uniform(kb, (out_f,), jnp.float32, -bound, bound)
    return w, b


def reference(x, w1, b1, w2, b2, w3, b3):
    h = jnp.maximum(x @ w1.T + b1, 0.0)
    h = jnp.maximum(h @ w2.T + b2, 0.0)
    return h @ w3.T + b3


if __name__ == "__main__":
    key = jax.random.PRNGKey(0)
    kx, k1, k2, k3 = jax.random.split(key, 4)

    w1, b1 = init_linear(k1, 8, 32)
    w2, b2 = init_linear(k2, 32, 16)
    w3, b3 = init_linear(k3, 16, 1)

    # Pack parameters ONCE (hoisted out of the forward path).
    params = pack_params(w1, b1, w2, b2, w3, b3)
    jax.block_until_ready(params)

    ok = True
    # B=8/64: tiny single-tile path; B=2048: 4 exact tiles (pipelined, both
    # TCs); B=1000: ragged final tile (B % tb != 0) to check OOB padding /
    # masked output writes.
    for B in (8, 64, 2048, 1000):
        x = jax.random.normal(jax.random.fold_in(kx, B), (B, 8), jnp.float32)
        out = mlp_forward(x, params)
        jax.block_until_ready(out)
        ref = reference(x, w1, b1, w2, b2, w3, b3)
        assert out.shape == (B, 1)
        ok = ok and bool(jnp.allclose(out, ref, atol=1e-4, rtol=1e-4))

    assert ok, "mismatch vs reference"
    print("KERNEL_OK")
</pallas_src>

<mosaic_0001>
module attributes {stable_mosaic.version = 11 : i64} {
  func.func @mlp_kernel(%arg0: i32, %arg1: memref<56x128xf32, #tpu.memory_space<vmem>>, %arg2: memref<8x8xf32, #tpu.memory_space<vmem>>, %arg3: memref<1x8xf32, #tpu.memory_space<vmem>>) attributes {dimension_semantics = [#tpu.dimension_semantics<parallel>], iteration_bounds = array<i64: 1>, scalar_prefetch = 0 : i64, scratch_operands = 0 : i64, tpu.core_type = #tpu.core_type<tc>, window_params = [{pipeline_mode = #tpu.pipeline_mode<synchronous>, transform_indices = @transform_0, window_bounds = array<i64: 56, 128>}, {transform_indices = @transform_1, window_bounds = array<i64: 8, 8>}, {transform_indices = @transform_2, window_bounds = array<i64: 1, 8>}]} {
    %c0 = arith.constant 0 : index
    %c0_0 = arith.constant 0 : index
    %0 = vector.load %arg1[%c0, %c0_0] : memref<56x128xf32, #tpu.memory_space<vmem>>, vector<32x8xf32>
    %c0_1 = arith.constant 0 : index
    %c8 = arith.constant 8 : index
    %1 = vector.load %arg1[%c0_1, %c8] : memref<56x128xf32, #tpu.memory_space<vmem>>, vector<32x1xf32>
    %c32 = arith.constant 32 : index
    %c0_2 = arith.constant 0 : index
    %2 = vector.load %arg1[%c32, %c0_2] : memref<56x128xf32, #tpu.memory_space<vmem>>, vector<16x32xf32>
    %c32_3 = arith.constant 32 : index
    %c32_4 = arith.constant 32 : index
    %3 = vector.load %arg1[%c32_3, %c32_4] : memref<56x128xf32, #tpu.memory_space<vmem>>, vector<16x1xf32>
    %c48 = arith.constant 48 : index
    %c0_5 = arith.constant 0 : index
    %4 = vector.load %arg1[%c48, %c0_5] : memref<56x128xf32, #tpu.memory_space<vmem>>, vector<1x16xf32>
    %c48_6 = arith.constant 48 : index
    %c16 = arith.constant 16 : index
    %5 = vector.load %arg1[%c48_6, %c16] : memref<56x128xf32, #tpu.memory_space<vmem>>, vector<1x1xf32>
    %c0_7 = arith.constant 0 : index
    %c0_8 = arith.constant 0 : index
    %6 = vector.load %arg2[%c0_7, %c0_8] : memref<8x8xf32, #tpu.memory_space<vmem>>, vector<8x8xf32>
    %7 = tpu.transpose %6, [1, 0] : vector<8x8xf32> -> vector<8x8xf32>
    %cst = arith.constant dense<0.000000e+00> : vector<32x8xf32>
    %8 = tpu.matmul %0, %7, %cst {dimension_numbers = #tpu.dot_dimension_numbers<[1], [0], [0], [1], [0, 0, 1, 1], [], []>} : vector<32x8xf32>, vector<8x8xf32>, vector<32x8xf32> -> vector<32x8xf32>
    %9 = vector.broadcast %1 : vector<32x1xf32> to vector<32x8xf32>
    %10 = arith.addf %8, %9 : vector<32x8xf32>
    %cst_9 = arith.constant 0.000000e+00 : f32
    %11 = vector.broadcast %cst_9 : f32 to vector<32x8xf32>
    %12 = arith.maximumf %10, %11 : vector<32x8xf32>
    %cst_10 = arith.constant dense<0.000000e+00> : vector<16x8xf32>
    %13 = tpu.matmul %2, %12, %cst_10 {dimension_numbers = #tpu.dot_dimension_numbers<[1], [0], [0], [1], [0, 0, 1, 1], [], []>} : vector<16x32xf32>, vector<32x8xf32>, vector<16x8xf32> -> vector<16x8xf32>
    %14 = vector.broadcast %3 : vector<16x1xf32> to vector<16x8xf32>
    %15 = arith.addf %13, %14 : vector<16x8xf32>
    %cst_11 = arith.constant 0.000000e+00 : f32
    %16 = vector.broadcast %cst_11 : f32 to vector<16x8xf32>
    %17 = arith.maximumf %15, %16 : vector<16x8xf32>
    %cst_12 = arith.constant dense<0.000000e+00> : vector<1x8xf32>
    %18 = tpu.matmul %4, %17, %cst_12 {dimension_numbers = #tpu.dot_dimension_numbers<[1], [0], [0], [1], [0, 0, 1, 1], [], []>} : vector<1x16xf32>, vector<16x8xf32>, vector<1x8xf32> -> vector<1x8xf32>
    %19 = vector.broadcast %5 : vector<1x1xf32> to vector<1x8xf32>
    %20 = arith.addf %18, %19 : vector<1x8xf32>
    %c0_13 = arith.constant 0 : index
    %c0_14 = arith.constant 0 : index
    %21 = vector.load %arg3[%c0_13, %c0_14] : memref<1x8xf32, #tpu.memory_space<vmem>>, vector<1x8xf32>
    tpu.vector_store %arg3[%c0_13, %c0_14], %20 {strides = array<i32>} : memref<1x8xf32, #tpu.memory_space<vmem>>, vector<1x8xf32>,
    return
  }
  func.func @transform_0(%arg0: i32) -> (i32, i32) {
    %c0_i32 = arith.constant 0 : i32
    %c0_i32_0 = arith.constant 0 : i32
    %c0_i32_1 = arith.constant 0 : i32
    return %c0_i32, %c0_i32_0 : i32, i32
  }
  func.func @transform_1(%arg0: i32) -> (i32, i32) {
    %c0_i32 = arith.constant 0 : i32
    %c0_i32_0 = arith.constant 0 : i32
    return %arg0, %c0_i32 : i32, i32
  }
  func.func @transform_2(%arg0: i32) -> (i32, i32) {
    %c0_i32 = arith.constant 0 : i32
    %c0_i32_0 = arith.constant 0 : i32
    return %c0_i32, %arg0 : i32, i32
  }
}

</mosaic_0001>

<llo_original>
// kernel: tpu_custom_call.1
$region0: #{tpu_custom_call.1}
  #allocation0 [shape = 'u32[]', space=smem, size = 0x4, offset = 0x4, fixed_abs, tag = 'smem constant byte address 0x4 - core index']
  #allocation1 [shape = 'u32[144,128]{1,0:T(1,128)}', space=vmem, size = 0x12000, scoped, tag = 'internal scratch']
  %s0 = inlined_call_operand.hbm [shape: f32[56,128], index: 0, kind: input, shape index: {}]
  %s1 = inlined_call_operand.hbm [shape: f32[8,8], index: 1, kind: input, shape index: {}]
  %s2 = inlined_call_operand.hbm [shape: f32[1,8], index: 2, kind: output, shape index: {}]
  %s3 = sld [smem:[#allocation0]]
  $region26: #{tpu_custom_call.1} parent=0
    _
  %s5 = ssub.s32 1, %s3
  %s6 = scalar_select 0, %s5, %s3
  $region1: #{tpu_custom_call.1} parent=0
    #allocation2 [shape = 'u8[28672]{0}', space=vmem, size = 0x7000, scoped, tag = 'input window, operand 0, single buffered']
    #allocation3 [shape = 's32[1]{0}', space=sflag, size = 0x4, scoped, tag = 'scoped memory for tpu_custom_call.1']
    #allocation4 [shape = 's32[1]{0}', space=sflag, size = 0x4, scoped, tag = 'scoped memory for tpu_custom_call.1']
    #allocation5 [shape = 'u8[4096]{0}', space=vmem, size = 0x1000, scoped, tag = 'input window, operand 1, single buffered']
    #allocation6 [shape = 's32[1]{0}', space=sflag, size = 0x4, scoped, tag = 'scoped memory for tpu_custom_call.1']
    #allocation7 [shape = 'u8[512]{0}', space=vmem, size = 0x400, scoped, tag = 'output window, operand 0, single buffered']
    %7 = vsyncpa [#allocation3], 0
    %8 = vsyncpa [#allocation6], 0
    %9 = vsyncpa [#allocation4], 0
    // Predicated region
    $region2: #{tpu_custom_call.1} parent=1 // pred_check
      _
    $region3: #{tpu_custom_call.1} parent=1 // pred_check_branch
      %11 = sbr.rel (0) target = $region5
    $region4: #{tpu_custom_call.1} parent=1 // pred_region
      %s13 = ssub.s32 896, 896
      %14 = vsyncadd [#allocation3], %s13
      %s15 = sshll.u32 [#allocation2], 4
      %s16 = int_to_ptr.vmem [resolvable:$true] %s15
      %21 = dma.hbm_to_vmem [thread:$0]  %s0, 896, %s16, [#allocation3], 128, 128, 8
    $region5: #{tpu_custom_call.1} parent=1 // pred_fallthru
      _
    // Predicated region
    $region6: #{tpu_custom_call.1} parent=1 // pred_check
      _
    $region7: #{tpu_custom_call.1} parent=1 // pred_check_branch
      %23 = sbr.rel (0) target = $region9
    $region8: #{tpu_custom_call.1} parent=1 // pred_region
      %s25 = ssub.s32 128, 128
      %26 = vsyncadd [#allocation6], %s25
      %s28 = sshll.u32 [#allocation5], 4
      %s29 = int_to_ptr.vmem [resolvable:$true] %s28
      %31 = dma.hbm_to_vmem [thread:$0]  %s1, 128, %s29, [#allocation6]
    $region9: #{tpu_custom_call.1} parent=1 // pred_fallthru
      _
    // Predicated region
    $region10: #{tpu_custom_call.1} parent=1 // pred_check
      _
    $region11: #{tpu_custom_call.1} parent=1 // pred_check_branch
      %33 = sbr.rel (0) target = $region13
    $region12: #{tpu_custom_call.1} parent=1 // pred_region
      %34 = dma.done [#allocation3], 896
    $region13: #{tpu_custom_call.1} parent=1 // pred_fallthru
      _
    // Predicated region
    $region14: #{tpu_custom_call.1} parent=1 // pred_check
      _
    $region15: #{tpu_custom_call.1} parent=1 // pred_check_branch
      %36 = sbr.rel (0) target = $region17
    $region16: #{tpu_custom_call.1} parent=1 // pred_region
      %37 = dma.done [#allocation6], 128
    $region17: #{tpu_custom_call.1} parent=1 // pred_fallthru
      _
    %v38 = vld [vmem:[#allocation2] sm:$0xff]
    %v39 = vld [vmem:[#allocation2 + $0x8] sm:$0xff]
    %v40 = vld [vmem:[#allocation2 + $0x10] sm:$0xff]
    %v41 = vld [vmem:[#allocation2 + $0x18] sm:$0xff]
    %v42 = vld [vmem:[#allocation2 + $0x20] sm:$0xff]
    %v43 = vld [vmem:[#allocation2 + $0x28] sm:$0xff]
    %v44 = vld [vmem:[#allocation2 + $0x30] sm:$0x1]
    %v45 = vld [vmem:[#allocation5] sm:$0xff]
    %47 = vset.pattern.permute.xlu0 8
    %48 = vperm.xlu0 %47, %v38
    %v49 = vpop.permute.xlu0 %48
    %52 = vset.pattern.permute.xlu0 8
    %53 = vperm.xlu0 %52, %v39
    %v54 = vpop.permute.xlu0 %53
    %57 = vset.pattern.permute.xlu0 8
    %58 = vperm.xlu0 %57, %v40
    %v59 = vpop.permute.xlu0 %58
    %62 = vset.pattern.permute.xlu0 8
    %63 = vperm.xlu0 %62, %v41
    %v64 = vpop.permute.xlu0 %63
    %vm66 = vcmask 64512
    %v67 = vsel %vm66, %v38, 0
    %v69 = vsel %vm66, %v39, 0
    %v71 = vsel %vm66, %v40, 0
    %v73 = vsel %vm66, %v41, 0
    %v76 = vsel %vm66, %v45, 0
    %78 = vmatprep.subr.mxu0 0.0
    %79 = vmatpush1.xpose.msra.mxu0 %v76
    %80 = vmatprep.subr.mxu0 0.0
    %81 = vmatpush1.xpose.msra.mxu0 0.0
    %82 = vmatprep.subr.mxu0 0.0
    %83 = vmatpush1.xpose.msra.mxu0 0.0
    %84 = vmatprep.subr.mxu0 0.0
    %85 = vmatpush1.xpose.msra.mxu0 0.0
    %86 = vmatprep.subr.mxu0 0.0
    %87 = vmatpush1.xpose.msra.mxu0 0.0
    %88 = vmatprep.subr.mxu0 0.0
    %89 = vmatpush1.xpose.msra.mxu0 0.0
    %90 = vmatprep.subr.mxu0 0.0
    %91 = vmatpush1.xpose.msra.mxu0 0.0
    %92 = vmatprep.subr.mxu0 0.0
    %93 = vmatpush1.xpose.msra.mxu0 0.0
    %94 = vmatprep.subr.mxu0 0.0
    %95 = vmatpush1.xpose.msra.mxu0 0.0
    %96 = vmatprep.subr.mxu0 0.0
    %97 = vmatpush1.xpose.msra.mxu0 0.0
    %98 = vmatprep.subr.mxu0 0.0
    %99 = vmatpush1.xpose.msra.mxu0 0.0
    %100 = vmatprep.subr.mxu0 0.0
    %101 = vmatpush1.xpose.msra.mxu0 0.0
    %102 = vmatprep.subr.mxu0 0.0
    %103 = vmatpush1.xpose.msra.mxu0 0.0
    %104 = vmatprep.subr.mxu0 0.0
    %105 = vmatpush1.xpose.msra.mxu0 0.0
    %106 = vmatprep.subr.mxu0 0.0
    %107 = vmatpush1.xpose.msra.mxu0 0.0
    %108 = vmatprep.subr.mxu0 0.0
    %109 = vmatpush1.xpose.msra.mxu0 0.0
    %110 = vmatprep.subr.mxu0 0.0
    %111 = vmatpush1.xpose.msra.mxu0 0.0
    %112 = vmatprep.subr.mxu0 0.0
    %113 = vmatpush1.xpose.msra.mxu0 0.0
    %114 = vmatprep.subr.mxu0 0.0
    %115 = vmatpush1.xpose.msra.mxu0 0.0
    %116 = vmatprep.subr.mxu0 0.0
    %117 = vmatpush1.xpose.msra.mxu0 0.0
    %118 = vmatprep.subr.mxu0 0.0
    %119 = vmatpush1.xpose.msra.mxu0 0.0
    %120 = vmatprep.subr.mxu0 0.0
    %121 = vmatpush1.xpose.msra.mxu0 0.0
    %122 = vmatprep.subr.mxu0 0.0
    %123 = vmatpush1.xpose.msra.mxu0 0.0
    %124 = vmatprep.subr.mxu0 0.0
    %125 = vmatpush1.xpose.msra.mxu0 0.0
    %126 = vmatprep.subr.mxu0 0.0
    %127 = vmatpush1.xpose.msra.mxu0 0.0
    %128 = vmatprep.subr.mxu0 0.0
    %129 = vmatpush1.xpose.msra.mxu0 0.0
    %130 = vmatprep.subr.mxu0 0.0
    %131 = vmatpush1.xpose.msra.mxu0 0.0
    %132 = vmatprep.subr.mxu0 0.0
    %133 = vmatpush1.xpose.msra.mxu0 0.0
    %134 = vmatprep.subr.mxu0 0.0
    %135 = vmatpush1.xpose.msra.mxu0 0.0
    %136 = vmatprep.subr.mxu0 0.0
    %137 = vmatpush1.xpose.msra.mxu0 0.0
    %138 = vmatprep.subr.mxu0 0.0
    %139 = vmatpush1.xpose.msra.mxu0 0.0
    %140 = vmatprep.subr.mxu0 0.0
    %141 = vmatpush1.xpose.msra.mxu0 0.0
    %142 = vmatprep.mubr.f32.mxu0 0.0
    %143 = vmatmul.mubr.f32.gmra.mrb[0].mxu0 %v67
    %v144 = vpop.f32.mrb[0].mxu0
    %v145 = vadd.f32 %v49, %v144
    %v146 = vpop.f32.mrb[0].mxu0
    %147 = vmatprep.mubr.f32.mxu0 0.0
    %148 = vmatmul.mubr.f32.gmra.mrb[0].mxu0 %v69
    %v149 = vpop.f32.mrb[0].mxu0
    %v150 = vadd.f32 %v54, %v149
    %v151 = vpop.f32.mrb[0].mxu0
    %152 = vmatprep.mubr.f32.mxu0 0.0
    %153 = vmatmul.mubr.f32.gmra.mrb[0].mxu0 %v71
    %v154 = vpop.f32.mrb[0].mxu0
    %v155 = vadd.f32 %v59, %v154
    %v156 = vpop.f32.mrb[0].mxu0
    %157 = vmatprep.mubr.f32.mxu0 0.0
    %158 = vmatmul.mubr.f32.gmra.mrb[0].mxu0 %v73
    %v159 = vpop.f32.mrb[0].mxu0
    %v160 = vadd.f32 %v64, %v159
    %v161 = vpop.f32.mrb[0].mxu0
    %162 = vdwg.mxu0
    %v163 = vmax.f32 %v145, 0.0
    %v164 = vmax.f32 %v150, 0.0
    %v165 = vmax.f32 %v155, 0.0
    %v166 = vmax.f32 %v160, 0.0
    %168 = vset.pattern.permute.xlu0 32
    %169 = vperm.xlu0 %168, %v42
    %v170 = vpop.permute.xlu0 %169
    %173 = vset.pattern.permute.xlu0 32
    %174 = vperm.xlu0 %173, %v43
    %v175 = vpop.permute.xlu0 %174
    %vm177 = vcmask 261120
    %v178 = vsel %vm177, %v42, 0
    %v180 = vsel %vm177, %v43, 0
    %182 = vmatprep.subr.mxu0 0.0
    %183 = vmatpush1.msra.mxu0 %v163
    %184 = vmatprep.subr.mxu0 0.0
    %185 = vmatpush1.msra.mxu0 %v164
    %186 = vmatprep.subr.mxu0 0.0
    %187 = vmatpush1.msra.mxu0 %v165
    %188 = vmatprep.subr.mxu0 0.0
    %189 = vmatpush1.msra.mxu0 %v166
    %190 = vmatprep.subr.mxu0 0.0
    %191 = vmatpush1.msra.mxu0 0.0
    %192 = vmatprep.subr.mxu0 0.0
    %193 = vmatpush1.msra.mxu0 0.0
    %194 = vmatprep.subr.mxu0 0.0
    %195 = vmatpush1.msra.mxu0 0.0
    %196 = vmatprep.subr.mxu0 0.0
    %197 = vmatpush1.msra.mxu0 0.0
    %198 = vmatprep.subr.mxu0 0.0
    %199 = vmatpush1.msra.mxu0 0.0
    %200 = vmatprep.subr.mxu0 0.0
    %201 = vmatpush1.msra.mxu0 0.0
    %202 = vmatprep.subr.mxu0 0.0
    %203 = vmatpush1.msra.mxu0 0.0
    %204 = vmatprep.subr.mxu0 0.0
    %205 = vmatpush1.msra.mxu0 0.0
    %206 = vmatprep.subr.mxu0 0.0
    %207 = vmatpush1.msra.mxu0 0.0
    %208 = vmatprep.subr.mxu0 0.0
    %209 = vmatpush1.msra.mxu0 0.0
    %210 = vmatprep.subr.mxu0 0.0
    %211 = vmatpush1.msra.mxu0 0.0
    %212 = vmatprep.subr.mxu0 0.0
    %213 = vmatpush1.msra.mxu0 0.0
    %214 = vmatprep.subr.mxu0 0.0
    %215 = vmatpush1.msra.mxu0 0.0
    %216 = vmatprep.subr.mxu0 0.0
    %217 = vmatpush1.msra.mxu0 0.0
    %218 = vmatprep.subr.mxu0 0.0
    %219 = vmatpush1.msra.mxu0 0.0
    %220 = vmatprep.subr.mxu0 0.0
    %221 = vmatpush1.msra.mxu0 0.0
    %222 = vmatprep.subr.mxu0 0.0
    %223 = vmatpush1.msra.mxu0 0.0
    %224 = vmatprep.subr.mxu0 0.0
    %225 = vmatpush1.msra.mxu0 0.0
    %226 = vmatprep.subr.mxu0 0.0
    %227 = vmatpush1.msra.mxu0 0.0
    %228 = vmatprep.subr.mxu0 0.0
    %229 = vmatpush1.msra.mxu0 0.0
    %230 = vmatprep.subr.mxu0 0.0
    %231 = vmatpush1.msra.mxu0 0.0
    %232 = vmatprep.subr.mxu0 0.0
    %233 = vmatpush1.msra.mxu0 0.0
    %234 = vmatprep.subr.mxu0 0.0
    %235 = vmatpush1.msra.mxu0 0.0
    %236 = vmatprep.subr.mxu0 0.0
    %237 = vmatpush1.msra.mxu0 0.0
    %238 = vmatprep.subr.mxu0 0.0
    %239 = vmatpush1.msra.mxu0 0.0
    %240 = vmatprep.subr.mxu0 0.0
    %241 = vmatpush1.msra.mxu0 0.0
    %242 = vmatprep.subr.mxu0 0.0
    %243 = vmatpush1.msra.mxu0 0.0
    %244 = vmatprep.subr.mxu0 0.0
    %245 = vmatpush1.msra.mxu0 0.0
    %246 = vmatprep.mubr.f32.mxu0 0.0
    %247 = vmatmul.mubr.f32.gmra.mrb[0].mxu0 %v178
    %v248 = vpop.f32.mrb[0].mxu0
    %v249 = vadd.f32 %v170, %v248
    %v250 = vpop.f32.mrb[0].mxu0
    %251 = vmatprep.mubr.f32.mxu0 0.0
    %252 = vmatmul.mubr.f32.gmra.mrb[0].mxu0 %v180
    %v253 = vpop.f32.mrb[0].mxu0
    %v254 = vadd.f32 %v175, %v253
    %v255 = vpop.f32.mrb[0].mxu0
    %256 = vdwg.mxu0
    %v257 = vmax.f32 %v249, 0.0
    %v258 = vmax.f32 %v254, 0.0
    %260 = vset.pattern.permute.xlu0 16
    %261 = vperm.xlu0 %260, %v44
    %v262 = vpop.permute.xlu0 %261
    %vm264 = vcmask 130048
    %v265 = vsel %vm264, %v44, 0
    %267 = vmatprep.subr.mxu0 0.0
    %268 = vmatpush1.msra.mxu0 %v257
    %269 = vmatprep.subr.mxu0 0.0
    %270 = vmatpush1.msra.mxu0 %v258
    %271 = vmatprep.subr.mxu0 0.0
    %272 = vmatpush1.msra.mxu0 0.0
    %273 = vmatprep.subr.mxu0 0.0
    %274 = vmatpush1.msra.mxu0 0.0
    %275 = vmatprep.subr.mxu0 0.0
    %276 = vmatpush1.msra.mxu0 0.0
    %277 = vmatprep.subr.mxu0 0.0
    %278 = vmatpush1.msra.mxu0 0.0
    %279 = vmatprep.subr.mxu0 0.0
    %280 = vmatpush1.msra.mxu0 0.0
    %281 = vmatprep.subr.mxu0 0.0
    %282 = vmatpush1.msra.mxu0 0.0
    %283 = vmatprep.subr.mxu0 0.0
    %284 = vmatpush1.msra.mxu0 0.0
    %285 = vmatprep.subr.mxu0 0.0
    %286 = vmatpush1.msra.mxu0 0.0
    %287 = vmatprep.subr.mxu0 0.0
    %288 = vmatpush1.msra.mxu0 0.0
    %289 = vmatprep.subr.mxu0 0.0
    %290 = vmatpush1.msra.mxu0 0.0
    %291 = vmatprep.subr.mxu0 0.0
    %292 = vmatpush1.msra.mxu0 0.0
    %293 = vmatprep.subr.mxu0 0.0
    %294 = vmatpush1.msra.mxu0 0.0
    %295 = vmatprep.subr.mxu0 0.0
    %296 = vmatpush1.msra.mxu0 0.0
    %297 = vmatprep.subr.mxu0 0.0
    %298 = vmatpush1.msra.mxu0 0.0
    %299 = vmatprep.subr.mxu0 0.0
    %300 = vmatpush1.msra.mxu0 0.0
    %301 = vmatprep.subr.mxu0 0.0
    %302 = vmatpush1.msra.mxu0 0.0
    %303 = vmatprep.subr.mxu0 0.0
    %304 = vmatpush1.msra.mxu0 0.0
    %305 = vmatprep.subr.mxu0 0.0
    %306 = vmatpush1.msra.mxu0 0.0
    %307 = vmatprep.subr.mxu0 0.0
    %308 = vmatpush1.msra.mxu0 0.0
    %309 = vmatprep.subr.mxu0 0.0
    %310 = vmatpush1.msra.mxu0 0.0
    %311 = vmatprep.subr.mxu0 0.0
    %312 = vmatpush1.msra.mxu0 0.0
    %313 = vmatprep.subr.mxu0 0.0
    %314 = vmatpush1.msra.mxu0 0.0
    %315 = vmatprep.subr.mxu0 0.0
    %316 = vmatpush1.msra.mxu0 0.0
    %317 = vmatprep.subr.mxu0 0.0
    %318 = vmatpush1.msra.mxu0 0.0
    %319 = vmatprep.subr.mxu0 0.0
    %320 = vmatpush1.msra.mxu0 0.0
    %321 = vmatprep.subr.mxu0 0.0
    %322 = vmatpush1.msra.mxu0 0.0
    %323 = vmatprep.subr.mxu0 0.0
    %324 = vmatpush1.msra.mxu0 0.0
    %325 = vmatprep.subr.mxu0 0.0
    %326 = vmatpush1.msra.mxu0 0.0
    %327 = vmatprep.subr.mxu0 0.0
    %328 = vmatpush1.msra.mxu0 0.0
    %329 = vmatprep.subr.mxu0 0.0
    %330 = vmatpush1.msra.mxu0 0.0
    %331 = vmatprep.mubr.f32.mxu0 0.0
    %332 = vmatmul.mubr.f32.gmra.mrb[0].mxu0 %v265
    %v333 = vpop.f32.mrb[0].mxu0
    %v334 = vadd.f32 %v262, %v333
    %v335 = vpop.f32.mrb[0].mxu0
    %336 = vdwg.mxu0
    %vm337 = vcmask 57344
    %338 = vst.msk [vmem:[#allocation7] sm:$0x1] %vm337, %v334
    // Predicated region
    $region18: #{tpu_custom_call.1} parent=1 // pred_check
      _
    $region19: #{tpu_custom_call.1} parent=1 // pred_check_branch
      %340 = sbr.rel (0) target = $region21
    $region20: #{tpu_custom_call.1} parent=1 // pred_region
      %s342 = ssub.s32 16, 16
      %343 = vsyncadd [#allocation4], %s342
      %s345 = sshll.u32 [#allocation7], 4
      %s346 = int_to_ptr.vmem [resolvable:$true] %s345
      %348 = dma.vmem_to_hbm [thread:$0]  %s346, 16, %s2, [#allocation4]
    $region21: #{tpu_custom_call.1} parent=1 // pred_fallthru
      _
    // Predicated region
    $region22: #{tpu_custom_call.1} parent=1 // pred_check
      _
    $region23: #{tpu_custom_call.1} parent=1 // pred_check_branch
      %350 = sbr.rel (0) target = $region25
    $region24: #{tpu_custom_call.1} parent=1 // pred_region
      %351 = dma.done [#allocation4], 16
    $region25: #{tpu_custom_call.1} parent=1 // pred_fallthru
      _
    %352 = vsyncpa [#allocation3], 1
    %353 = vsyncpa [#allocation6], 1
    %354 = vsyncpa [#allocation4], 1

</llo_original>
